<compile_context>
chip_gen: v6e
topology: v6e:2x2x1
jax: 0.10.0
libtpu: 0.0.40
codegen_flags: <defaults>
</compile_context>

<pallas_src>
import functools

import jax
import jax.numpy as jnp
from jax.experimental import pallas as pl
from jax.experimental.pallas import tpu as pltpu

H1 = 256  # fc1 output width, fixed by the module definition


def _round_up(x, m):
    return ((x + m - 1) // m) * m


def dqn_mlp_kernel(x_ref, w1_ref, b1_ref, w2_ref, b2_ref, w3_ref, b3_ref, o_ref):
    # fc1 + ReLU:  (TB, S) @ (S, 256)
    h1 = jnp.dot(x_ref[...], w1_ref[...], preferred_element_type=jnp.float32)
    h1 = jnp.maximum(h1 + b1_ref[...], 0.0)
    # fc2 + ReLU:  (TB, 256) @ (256, H2p)   hidden zero-padded to 128 lanes
    h2 = jnp.dot(h1, w2_ref[...], preferred_element_type=jnp.float32)
    h2 = jnp.maximum(h2 + b2_ref[...], 0.0)
    # fc3:         (TB, H2p) @ (H2p, A)     only the A useful action columns exist
    out = jnp.dot(h2, w3_ref[...], preferred_element_type=jnp.float32)
    o_ref[...] = (out + b3_ref[...]).astype(o_ref.dtype)


def prepare_params(params):
    """One-time padding of parameters to TPU-friendly shapes (call once, cache).

    Zero-padding the hidden dim (fc2 cols / b2 / fc3 rows) keeps the math exact:
    ReLU(0 + 0) = 0 and zero rows of w3 contribute nothing to the output.
    """
    w1, b1, w2, b2, w3, b3 = params
    H2 = w2.shape[1]
    H2p = max(_round_up(H2, 128), 128)
    w2p = jnp.pad(w2, ((0, 0), (0, H2p - H2)))
    b2p = jnp.pad(b2, ((0, 0), (0, H2p - H2)))
    w3p = jnp.pad(w3, ((0, H2p - H2), (0, 0)))
    return (w1, b1, w2p, b2p, w3p, b3)


def _pick_batch_tiling(B, batch_tile):
    """Balanced, sublane-aligned batch tiles; >=2 grid steps for non-trivial B
    so the 'parallel' batch axis can shard across both TensorCores on v7x."""
    n = max(1, pl.cdiv(B, batch_tile))
    if n == 1 and B > 8:
        n = 2
    TB = _round_up(pl.cdiv(B, n), 8)
    grid = pl.cdiv(B, TB)
    return TB, grid


def _vmem_limit_bytes(TB, S, H2p, A):
    f32 = 4
    weights = (S * H1 + H1 + H1 * H2p + H2p + H2p * A + A) * f32
    stream = 2 * TB * (_round_up(S, 128) + _round_up(A, 128)) * f32   # x/out dbl-buffers
    temps = TB * (H1 + H2p + _round_up(A, 128)) * f32                 # h1/h2/out vregs
    need = 2 * weights + stream + 2 * temps
    need = _round_up(need, 1 << 20)
    # Keep above v5e's 16 MiB scoped default, well below v7x's 64 MiB physical.
    return int(min(max(need, 16 << 20), 32 << 20))


@functools.partial(jax.jit, static_argnames=("batch_tile",))
def dqn_forward(x, kernel_params, *, batch_tile=2048):
    """Fused 3-layer MLP forward.

    x: (B, state_size) f32.  kernel_params: output of prepare_params.
    Returns (B, num_actions) f32.
    """
    w1, b1, w2p, b2p, w3p, b3 = kernel_params
    B, S = x.shape
    H2p = w2p.shape[1]
    A = w3p.shape[1]

    TB, grid = _pick_batch_tiling(B, batch_tile)

    # Weights/biases: full-array blocks with constant index_map -> DMA'd once,
    # resident in VMEM across all batch tiles.
    def resident(a):
        nd = a.ndim
        return pl.BlockSpec(a.shape, lambda i, _nd=nd: (0,) * _nd)

    out = pl.pallas_call(
        dqn_mlp_kernel,
        out_shape=jax.ShapeDtypeStruct((B, A), jnp.float32),
        grid=(grid,),
        in_specs=[
            pl.BlockSpec((TB, S), lambda i: (i, 0)),   # x streamed per batch tile
            resident(w1), resident(b1),
            resident(w2p), resident(b2p),
            resident(w3p), resident(b3),
        ],
        # Output block last dim == full array dim (num_actions): legal even when
        # < 128, and keeps HBM writeback to only the useful action columns.
        out_specs=pl.BlockSpec((TB, A), lambda i: (i, 0)),
        compiler_params=pltpu.CompilerParams(
            dimension_semantics=("parallel",),          # megacore sharding on v7x
            vmem_limit_bytes=_vmem_limit_bytes(TB, S, H2p, A),
        ),
    )(x, w1, b1, w2p, b2p, w3p, b3)

    return out


def init_params(key, state_size, hidden_size, num_actions):
    """Deterministic init mimicking PyTorch nn.Linear default (U(+/- 1/sqrt(fan_in))).
    Weights stored as (in_features, out_features)."""
    def linear(k, fan_in, fan_out):
        kw, kb = jax.random.split(k)
        bound = 1.0 / jnp.sqrt(jnp.float32(fan_in))
        w = jax.random.uniform(kw, (fan_in, fan_out), jnp.float32, -bound, bound)
        b = jax.random.uniform(kb, (1, fan_out), jnp.float32, -bound, bound)
        return w, b

    k1, k2, k3 = jax.random.split(key, 3)
    w1, b1 = linear(k1, state_size, H1)
    w2, b2 = linear(k2, H1, hidden_size)
    w3, b3 = linear(k3, hidden_size, num_actions)
    return (w1, b1, w2, b2, w3, b3)


def reference_forward(x, params):
    w1, b1, w2, b2, w3, b3 = params
    h1 = jnp.maximum(x @ w1 + b1, 0.0)
    h2 = jnp.maximum(h1 @ w2 + b2, 0.0)
    return h2 @ w3 + b3


if __name__ == "__main__":
    hidden_size = 32
    state_size = 16
    num_actions = 8
    batch = 2

    key = jax.random.PRNGKey(0)
    kx, kp = jax.random.split(key)
    x = jax.random.normal(kx, (batch, state_size), jnp.float32)
    params = init_params(kp, state_size, hidden_size, num_actions)
    kernel_params = prepare_params(params)   # one-time padding, cached

    out = dqn_forward(x, kernel_params)
    out = jax.block_until_ready(out)

    ref = reference_forward(x, params)
    assert out.shape == (batch, num_actions)
    assert jnp.allclose(out, ref, atol=1e-5, rtol=1e-5), "mismatch vs JAX reference"

    # Larger, non-divisible batch: exercises the multi-tile grid, the balanced
    # tile split and the masked partial final block.
    xb = jax.random.normal(kx, (1037, state_size), jnp.float32)
    outb = jax.block_until_ready(dqn_forward(xb, kernel_params, batch_tile=512))
    refb = reference_forward(xb, params)
    assert outb.shape == (1037, num_actions)
    assert jnp.allclose(outb, refb, atol=1e-4, rtol=1e-4), "mismatch on large batch"

    print("KERNEL_OK")
</pallas_src>

<mosaic_0001>
module attributes {stable_mosaic.version = 11 : i64} {
  func.func @dqn_mlp_kernel(%arg0: i32, %arg1: memref<8x16xf32, #tpu.memory_space<vmem>>, %arg2: memref<16x256xf32, #tpu.memory_space<vmem>>, %arg3: memref<1x256xf32, #tpu.memory_space<vmem>>, %arg4: memref<256x128xf32, #tpu.memory_space<vmem>>, %arg5: memref<1x128xf32, #tpu.memory_space<vmem>>, %arg6: memref<128x8xf32, #tpu.memory_space<vmem>>, %arg7: memref<1x8xf32, #tpu.memory_space<vmem>>, %arg8: memref<8x8xf32, #tpu.memory_space<vmem>>) attributes {dimension_semantics = [#tpu.dimension_semantics<parallel>], iteration_bounds = array<i64: 1>, scalar_prefetch = 0 : i64, scratch_operands = 0 : i64, tpu.core_type = #tpu.core_type<tc>, window_params = [{transform_indices = @transform_0, window_bounds = array<i64: 8, 16>}, {pipeline_mode = #tpu.pipeline_mode<synchronous>, transform_indices = @transform_1, window_bounds = array<i64: 16, 256>}, {pipeline_mode = #tpu.pipeline_mode<synchronous>, transform_indices = @transform_2, window_bounds = array<i64: 1, 256>}, {pipeline_mode = #tpu.pipeline_mode<synchronous>, transform_indices = @transform_3, window_bounds = array<i64: 256, 128>}, {pipeline_mode = #tpu.pipeline_mode<synchronous>, transform_indices = @transform_4, window_bounds = array<i64: 1, 128>}, {pipeline_mode = #tpu.pipeline_mode<synchronous>, transform_indices = @transform_5, window_bounds = array<i64: 128, 8>}, {pipeline_mode = #tpu.pipeline_mode<synchronous>, transform_indices = @transform_6, window_bounds = array<i64: 1, 8>}, {transform_indices = @transform_7, window_bounds = array<i64: 8, 8>}]} {
    %c0 = arith.constant 0 : index
    %c0_0 = arith.constant 0 : index
    %0 = vector.load %arg1[%c0, %c0_0] : memref<8x16xf32, #tpu.memory_space<vmem>>, vector<8x16xf32>
    %c0_1 = arith.constant 0 : index
    %c0_2 = arith.constant 0 : index
    %1 = vector.load %arg2[%c0_1, %c0_2] : memref<16x256xf32, #tpu.memory_space<vmem>>, vector<16x256xf32>
    %cst = arith.constant dense<0.000000e+00> : vector<8x256xf32>
    %2 = tpu.matmul %0, %1, %cst {dimension_numbers = #tpu.dot_dimension_numbers<[1], [0], [0], [1], [0, 0, 1, 1], [], []>} : vector<8x16xf32>, vector<16x256xf32>, vector<8x256xf32> -> vector<8x256xf32>
    %c0_3 = arith.constant 0 : index
    %c0_4 = arith.constant 0 : index
    %3 = vector.load %arg3[%c0_3, %c0_4] : memref<1x256xf32, #tpu.memory_space<vmem>>, vector<1x256xf32>
    %4 = vector.broadcast %3 : vector<1x256xf32> to vector<8x256xf32>
    %5 = arith.addf %2, %4 : vector<8x256xf32>
    %cst_5 = arith.constant 0.000000e+00 : f32
    %6 = vector.broadcast %cst_5 : f32 to vector<8x256xf32>
    %7 = arith.maximumf %5, %6 : vector<8x256xf32>
    %c0_6 = arith.constant 0 : index
    %c0_7 = arith.constant 0 : index
    %8 = vector.load %arg4[%c0_6, %c0_7] : memref<256x128xf32, #tpu.memory_space<vmem>>, vector<256x128xf32>
    %cst_8 = arith.constant dense<0.000000e+00> : vector<8x128xf32>
    %9 = tpu.matmul %7, %8, %cst_8 {dimension_numbers = #tpu.dot_dimension_numbers<[1], [0], [0], [1], [0, 0, 1, 1], [], []>} : vector<8x256xf32>, vector<256x128xf32>, vector<8x128xf32> -> vector<8x128xf32>
    %c0_9 = arith.constant 0 : index
    %c0_10 = arith.constant 0 : index
    %10 = vector.load %arg5[%c0_9, %c0_10] : memref<1x128xf32, #tpu.memory_space<vmem>>, vector<1x128xf32>
    %11 = vector.broadcast %10 : vector<1x128xf32> to vector<8x128xf32>
    %12 = arith.addf %9, %11 : vector<8x128xf32>
    %cst_11 = arith.constant 0.000000e+00 : f32
    %13 = vector.broadcast %cst_11 : f32 to vector<8x128xf32>
    %14 = arith.maximumf %12, %13 : vector<8x128xf32>
    %c0_12 = arith.constant 0 : index
    %c0_13 = arith.constant 0 : index
    %15 = vector.load %arg6[%c0_12, %c0_13] : memref<128x8xf32, #tpu.memory_space<vmem>>, vector<128x8xf32>
    %cst_14 = arith.constant dense<0.000000e+00> : vector<8x8xf32>
    %16 = tpu.matmul %14, %15, %cst_14 {dimension_numbers = #tpu.dot_dimension_numbers<[1], [0], [0], [1], [0, 0, 1, 1], [], []>} : vector<8x128xf32>, vector<128x8xf32>, vector<8x8xf32> -> vector<8x8xf32>
    %c0_15 = arith.constant 0 : index
    %c0_16 = arith.constant 0 : index
    %17 = vector.load %arg7[%c0_15, %c0_16] : memref<1x8xf32, #tpu.memory_space<vmem>>, vector<1x8xf32>
    %18 = vector.broadcast %17 : vector<1x8xf32> to vector<8x8xf32>
    %19 = arith.addf %16, %18 : vector<8x8xf32>
    %c0_17 = arith.constant 0 : index
    %c0_18 = arith.constant 0 : index
    %20 = vector.load %arg8[%c0_17, %c0_18] : memref<8x8xf32, #tpu.memory_space<vmem>>, vector<8x8xf32>
    tpu.vector_store %arg8[%c0_17, %c0_18], %19 {strides = array<i32>} : memref<8x8xf32, #tpu.memory_space<vmem>>, vector<8x8xf32>,
    return
  }
  func.func @transform_0(%arg0: i32) -> (i32, i32) {
    %c0_i32 = arith.constant 0 : i32
    %c0_i32_0 = arith.constant 0 : i32
    return %arg0, %c0_i32 : i32, i32
  }
  func.func @transform_1(%arg0: i32) -> (i32, i32) {
    %c0_i32 = arith.constant 0 : i32
    %c0_i32_0 = arith.constant 0 : i32
    %c0_i32_1 = arith.constant 0 : i32
    return %c0_i32, %c0_i32_0 : i32, i32
  }
  func.func @transform_2(%arg0: i32) -> (i32, i32) {
    %c0_i32 = arith.constant 0 : i32
    %c0_i32_0 = arith.constant 0 : i32
    %c0_i32_1 = arith.constant 0 : i32
    return %c0_i32, %c0_i32_0 : i32, i32
  }
  func.func @transform_3(%arg0: i32) -> (i32, i32) {
    %c0_i32 = arith.constant 0 : i32
    %c0_i32_0 = arith.constant 0 : i32
    %c0_i32_1 = arith.constant 0 : i32
    return %c0_i32, %c0_i32_0 : i32, i32
  }
  func.func @transform_4(%arg0: i32) -> (i32, i32) {
    %c0_i32 = arith.constant 0 : i32
    %c0_i32_0 = arith.constant 0 : i32
    %c0_i32_1 = arith.constant 0 : i32
    return %c0_i32, %c0_i32_0 : i32, i32
  }
  func.func @transform_5(%arg0: i32) -> (i32, i32) {
    %c0_i32 = arith.constant 0 : i32
    %c0_i32_0 = arith.constant 0 : i32
    %c0_i32_1 = arith.constant 0 : i32
    return %c0_i32, %c0_i32_0 : i32, i32
  }
  func.func @transform_6(%arg0: i32) -> (i32, i32) {
    %c0_i32 = arith.constant 0 : i32
    %c0_i32_0 = arith.constant 0 : i32
    %c0_i32_1 = arith.constant 0 : i32
    return %c0_i32, %c0_i32_0 : i32, i32
  }
  func.func @transform_7(%arg0: i32) -> (i32, i32) {
    %c0_i32 = arith.constant 0 : i32
    %c0_i32_0 = arith.constant 0 : i32
    return %arg0, %c0_i32 : i32, i32
  }
}

</mosaic_0001>

<llo_original>
// kernel: dqn_forward.1
$region0: #{dqn_forward.1}
  #allocation0 [shape = 'u32[]', space=smem, size = 0x4, offset = 0x4, fixed_abs, tag = 'smem constant byte address 0x4 - core index']
  #allocation1 [shape = 'u32[144,128]{1,0:T(1,128)}', space=vmem, size = 0x12000, scoped, tag = 'internal scratch']
  %s0 = inlined_call_operand.vmem [shape: f32[2,16], index: 0, kind: input, shape index: {}]
  %s1 = inlined_call_operand.vmem [shape: f32[16,256], index: 1, kind: input, shape index: {}]
  %s2 = inlined_call_operand.vmem [shape: f32[1,256], index: 2, kind: input, shape index: {}]
  %s3 = inlined_call_operand.hbm [shape: f32[256,128], index: 3, kind: input, shape index: {}]
  %s4 = inlined_call_operand.vmem [shape: f32[1,128], index: 4, kind: input, shape index: {}]
  %s5 = inlined_call_operand.vmem [shape: f32[128,8], index: 5, kind: input, shape index: {}]
  %s6 = inlined_call_operand.vmem [shape: f32[1,8], index: 6, kind: input, shape index: {}]
  %s7 = inlined_call_operand.hbm [shape: f32[2,8], index: 7, kind: output, shape index: {}]
  %s8 = sld [smem:[#allocation0]]
  $region42: #{dqn_forward.1} parent=0
    _
  %s10 = ssub.s32 1, %s8
  %s11 = scalar_select 0, %s10, %s8
  $region1: #{dqn_forward.1} parent=0
    #allocation2 [shape = 'u8[131072]{0}', space=vmem, size = 0x20000, scoped, tag = 'input window, operand 3, single buffered']
    #allocation3 [shape = 's32[1]{0}', space=sflag, size = 0x4, scoped, tag = 'scoped memory for dqn_forward.1']
    #allocation4 [shape = 's32[1]{0}', space=sflag, size = 0x4, scoped, tag = 'scoped memory for dqn_forward.1']
    #allocation5 [shape = 'u8[4096]{0}', space=vmem, size = 0x1000, scoped, tag = 'output window, operand 0, single buffered']
    %12 = vsyncpa [#allocation3], 0
    %13 = vsyncpa [#allocation4], 0
    // Predicated region
    $region2: #{dqn_forward.1} parent=1 // pred_check
      _
    $region3: #{dqn_forward.1} parent=1 // pred_check_branch
      %15 = sbr.rel (0) target = $region5
    $region4: #{dqn_forward.1} parent=1 // pred_region
      _
    $region5: #{dqn_forward.1} parent=1 // pred_fallthru
      _
    // Predicated region
    $region6: #{dqn_forward.1} parent=1 // pred_check
      _
    $region7: #{dqn_forward.1} parent=1 // pred_check_branch
      %17 = sbr.rel (0) target = $region9
    $region8: #{dqn_forward.1} parent=1 // pred_region
      _
    $region9: #{dqn_forward.1} parent=1 // pred_fallthru
      _
    // Predicated region
    $region10: #{dqn_forward.1} parent=1 // pred_check
      _
    $region11: #{dqn_forward.1} parent=1 // pred_check_branch
      %19 = sbr.rel (0) target = $region13
    $region12: #{dqn_forward.1} parent=1 // pred_region
      _
    $region13: #{dqn_forward.1} parent=1 // pred_fallthru
      _
    // Predicated region
    $region14: #{dqn_forward.1} parent=1 // pred_check
      _
    $region15: #{dqn_forward.1} parent=1 // pred_check_branch
      %21 = sbr.rel (0) target = $region17
    $region16: #{dqn_forward.1} parent=1 // pred_region
      %s23 = ssub.s32 4096, 4096
      %24 = vsyncadd [#allocation3], %s23
      %s25 = sshll.u32 [#allocation2], 4
      %s26 = int_to_ptr.vmem [resolvable:$true] %s25
      %31 = dma.hbm_to_vmem [thread:$0]  %s3, 4096, %s26, [#allocation3], 128, 128, 8
    $region17: #{dqn_forward.1} parent=1 // pred_fallthru
      _
    // Predicated region
    $region18: #{dqn_forward.1} parent=1 // pred_check
      _
    $region19: #{dqn_forward.1} parent=1 // pred_check_branch
      %33 = sbr.rel (0) target = $region21
    $region20: #{dqn_forward.1} parent=1 // pred_region
      _
    $region21: #{dqn_forward.1} parent=1 // pred_fallthru
      _
    // Predicated region
    $region22: #{dqn_forward.1} parent=1 // pred_check
      _
    $region23: #{dqn_forward.1} parent=1 // pred_check_branch
      %35 = sbr.rel (0) target = $region25
    $region24: #{dqn_forward.1} parent=1 // pred_region
      _
    $region25: #{dqn_forward.1} parent=1 // pred_fallthru
      _
    // Predicated region
    $region26: #{dqn_forward.1} parent=1 // pred_check
      _
    $region27: #{dqn_forward.1} parent=1 // pred_check_branch
      %37 = sbr.rel (0) target = $region29
    $region28: #{dqn_forward.1} parent=1 // pred_region
      _
    $region29: #{dqn_forward.1} parent=1 // pred_fallthru
      _
    // Predicated region
    $region30: #{dqn_forward.1} parent=1 // pred_check
      _
    $region31: #{dqn_forward.1} parent=1 // pred_check_branch
      %39 = sbr.rel (0) target = $region33
    $region32: #{dqn_forward.1} parent=1 // pred_region
      %40 = dma.done [#allocation3], 4096
    $region33: #{dqn_forward.1} parent=1 // pred_fallthru
      _
    %v41 = vld [vmem:[%s0] sm:$0xff]
    %v42 = vld [vmem:[%s1] sm:$0xff]
    %v43 = vld [vmem:[%s1 + $0x8] sm:$0xff]
    %v44 = vld [vmem:[%s1 + $0x10] sm:$0xff]
    %v45 = vld [vmem:[%s1 + $0x18] sm:$0xff]
    %v46 = vld [vmem:[%s2] sm:$0x3]
    %v48 = vlaneseq
    %v49 = vshrl.u32 %v48, 7
    %v50 = vsub.s32 0, %v49
    %v51 = vrot.slane %v46, %v50
    %v52 = vlaneseq
    %v53 = vshrl.u32 %v52, 7
    %v54 = vsub.s32 1, %v53
    %v55 = vrot.slane %v46, %v54
    %vm58 = vcmask 130048
    %v60 = vsel %vm58, %v41, 0
    %62 = vmatprep.subr.mxu0 0.0
    %63 = vmatpush1.msra.mxu0 0.0
    %64 = vmatprep.subr.mxu0 0.0
    %65 = vmatpush1.msra.mxu0 0.0
    %66 = vmatprep.subr.mxu0 0.0
    %67 = vmatpush1.msra.mxu0 0.0
    %68 = vmatprep.subr.mxu0 0.0
    %69 = vmatpush1.msra.mxu0 0.0
    %70 = vmatprep.subr.mxu0 0.0
    %71 = vmatpush1.msra.mxu0 0.0
    %72 = vmatprep.subr.mxu0 0.0
    %73 = vmatpush1.msra.mxu0 0.0
    %74 = vmatprep.subr.mxu0 0.0
    %75 = vmatpush1.msra.mxu0 0.0
    %76 = vmatprep.subr.mxu0 0.0
    %77 = vmatpush1.msra.mxu0 0.0
    %78 = vmatprep.subr.mxu0 0.0
    %79 = vmatpush1.msra.mxu0 0.0
    %80 = vmatprep.subr.mxu0 0.0
    %81 = vmatpush1.msra.mxu0 0.0
    %82 = vmatprep.subr.mxu0 0.0
    %83 = vmatpush1.msra.mxu0 0.0
    %84 = vmatprep.subr.mxu0 0.0
    %85 = vmatpush1.msra.mxu0 0.0
    %86 = vmatprep.subr.mxu0 0.0
    %87 = vmatpush1.msra.mxu0 0.0
    %88 = vmatprep.subr.mxu0 0.0
    %89 = vmatpush1.msra.mxu0 0.0
    %90 = vmatprep.subr.mxu0 %v45
    %91 = vmatpush1.msra.mxu0 %v44
    %92 = vmatprep.subr.mxu0 %v43
    %93 = vmatpush1.msra.mxu0 %v42
    %94 = vmatprep.subr.mxu0 0.0
    %95 = vmatpush2.msra.mxu0 0.0
    %96 = vmatprep.subr.mxu0 0.0
    %97 = vmatpush2.msra.mxu0 0.0
    %98 = vmatprep.subr.mxu0 0.0
    %99 = vmatpush2.msra.mxu0 0.0
    %100 = vmatprep.subr.mxu0 0.0
    %101 = vmatpush2.msra.mxu0 0.0
    %102 = vmatprep.subr.mxu0 0.0
    %103 = vmatpush2.msra.mxu0 0.0
    %104 = vmatprep.subr.mxu0 0.0
    %105 = vmatpush2.msra.mxu0 0.0
    %106 = vmatprep.subr.mxu0 0.0
    %107 = vmatpush2.msra.mxu0 0.0
    %108 = vmatprep.subr.mxu0 0.0
    %109 = vmatpush2.msra.mxu0 0.0
    %110 = vmatprep.subr.mxu0 0.0
    %111 = vmatpush2.msra.mxu0 0.0
    %112 = vmatprep.subr.mxu0 0.0
    %113 = vmatpush2.msra.mxu0 0.0
    %114 = vmatprep.subr.mxu0 0.0
    %115 = vmatpush2.msra.mxu0 0.0
    %116 = vmatprep.subr.mxu0 0.0
    %117 = vmatpush2.msra.mxu0 0.0
    %118 = vmatprep.subr.mxu0 0.0
    %119 = vmatpush2.msra.mxu0 0.0
    %120 = vmatprep.subr.mxu0 0.0
    %121 = vmatpush2.msra.mxu0 0.0
    %122 = vmatprep.subr.mxu0 0.0
    %123 = vmatpush2.msra.mxu0 0.0
    %124 = vmatprep.subr.mxu0 0.0
    %125 = vmatpush2.msra.mxu0 0.0
    %126 = vmatprep.mubr.f32.mxu0 0.0
    %127 = vmatmul.mubr.f32.gmra.mxu0 %v60
    %v128 = vpop.f32.mrf.mxu0
    %v129 = vadd.f32 %v51, %v128
    %v130 = vpop.f32.mrf.mxu0
    %v131 = vadd.f32 %v55, %v130
    %132 = vdwg.mxu0
    %v133 = vmax.f32 %v129, 0.0
    %v134 = vmax.f32 %v131, 0.0
    %v135 = vld [vmem:[#allocation2] sm:$0xff]
    %v136 = vld [vmem:[#allocation2 + $0x8] sm:$0xff]
    %v137 = vld [vmem:[#allocation2 + $0x10] sm:$0xff]
    %v138 = vld [vmem:[#allocation2 + $0x18] sm:$0xff]
    %v139 = vld [vmem:[#allocation2 + $0x20] sm:$0xff]
    %v140 = vld [vmem:[#allocation2 + $0x28] sm:$0xff]
    %v141 = vld [vmem:[#allocation2 + $0x30] sm:$0xff]
    %v142 = vld [vmem:[#allocation2 + $0x38] sm:$0xff]
    %v143 = vld [vmem:[#allocation2 + $0x40] sm:$0xff]
    %v144 = vld [vmem:[#allocation2 + $0x48] sm:$0xff]
    %v145 = vld [vmem:[#allocation2 + $0x50] sm:$0xff]
    %v146 = vld [vmem:[#allocation2 + $0x58] sm:$0xff]
    %v147 = vld [vmem:[#allocation2 + $0x60] sm:$0xff]
    %v148 = vld [vmem:[#allocation2 + $0x68] sm:$0xff]
    %v149 = vld [vmem:[#allocation2 + $0x70] sm:$0xff]
    %v150 = vld [vmem:[#allocation2 + $0x78] sm:$0xff]
    %v151 = vld [vmem:[#allocation2 + $0x80] sm:$0xff]
    %v152 = vld [vmem:[#allocation2 + $0x88] sm:$0xff]
    %v153 = vld [vmem:[#allocation2 + $0x90] sm:$0xff]
    %v154 = vld [vmem:[#allocation2 + $0x98] sm:$0xff]
    %v155 = vld [vmem:[#allocation2 + $0xa0] sm:$0xff]
    %v156 = vld [vmem:[#allocation2 + $0xa8] sm:$0xff]
    %v157 = vld [vmem:[#allocation2 + $0xb0] sm:$0xff]
    %v158 = vld [vmem:[#allocation2 + $0xb8] sm:$0xff]
    %v159 = vld [vmem:[#allocation2 + $0xc0] sm:$0xff]
    %v160 = vld [vmem:[#allocation2 + $0xc8] sm:$0xff]
    %v161 = vld [vmem:[#allocation2 + $0xd0] sm:$0xff]
    %v162 = vld [vmem:[#allocation2 + $0xd8] sm:$0xff]
    %v163 = vld [vmem:[#allocation2 + $0xe0] sm:$0xff]
    %v164 = vld [vmem:[#allocation2 + $0xe8] sm:$0xff]
    %v165 = vld [vmem:[#allocation2 + $0xf0] sm:$0xff]
    %v166 = vld [vmem:[#allocation2 + $0xf8] sm:$0xff]
    %v167 = vld [vmem:[%s4] sm:$0x1]
    %v169 = vlaneseq
    %v170 = vshrl.u32 %v169, 7
    %v171 = vsub.s32 0, %v170
    %v172 = vrot.slane %v167, %v171
    %174 = vmatprep.subr.mxu0 0.0
    %175 = vmatpush1.msra.mxu0 %v150
    %176 = vmatprep.subr.mxu0 0.0
    %177 = vmatpush1.msra.mxu0 %v149
    %178 = vmatprep.subr.mxu0 0.0
    %179 = vmatpush1.msra.mxu0 %v148
    %180 = vmatprep.subr.mxu0 0.0
    %181 = vmatpush1.msra.mxu0 %v147
    %182 = vmatprep.subr.mxu0 0.0
    %183 = vmatpush1.msra.mxu0 %v146
    %184 = vmatprep.subr.mxu0 0.0
    %185 = vmatpush1.msra.mxu0 %v145
    %186 = vmatprep.subr.mxu0 0.0
    %187 = vmatpush1.msra.mxu0 %v144
    %188 = vmatprep.subr.mxu0 0.0
    %189 = vmatpush1.msra.mxu0 %v143
    %190 = vmatprep.subr.mxu0 0.0
    %191 = vmatpush1.msra.mxu0 %v142
    %192 = vmatprep.subr.mxu0 0.0
    %193 = vmatpush1.msra.mxu0 %v141
    %194 = vmatprep.subr.mxu0 0.0
    %195 = vmatpush1.msra.mxu0 %v140
    %196 = vmatprep.subr.mxu0 0.0
    %197 = vmatpush1.msra.mxu0 %v139
    %198 = vmatprep.subr.mxu0 0.0
    %199 = vmatpush1.msra.mxu0 %v138
    %200 = vmatprep.subr.mxu0 0.0
    %201 = vmatpush1.msra.mxu0 %v137
    %202 = vmatprep.subr.mxu0 0.0
    %203 = vmatpush1.msra.mxu0 %v136
    %204 = vmatprep.subr.mxu0 0.0
    %205 = vmatpush1.msra.mxu0 %v135
    %206 = vmatprep.subr.mxu0 0.0
    %207 = vmatpush2.msra.mxu0 %v166
    %208 = vmatprep.subr.mxu0 0.0
    %209 = vmatpush2.msra.mxu0 %v165
    %210 = vmatprep.subr.mxu0 0.0
    %211 = vmatpush2.msra.mxu0 %v164
    %212 = vmatprep.subr.mxu0 0.0
    %213 = vmatpush2.msra.mxu0 %v163
    %214 = vmatprep.subr.mxu0 0.0
    %215 = vmatpush2.msra.mxu0 %v162
    %216 = vmatprep.subr.mxu0 0.0
    %217 = vmatpush2.msra.mxu0 %v161
    %218 = vmatprep.subr.mxu0 0.0
    %219 = vmatpush2.msra.mxu0 %v160
    %220 = vmatprep.subr.mxu0 0.0
    %221 = vmatpush2.msra.mxu0 %v159
    %222 = vmatprep.subr.mxu0 0.0
    %223 = vmatpush2.msra.mxu0 %v158
    %224 = vmatprep.subr.mxu0 0.0
    %225 = vmatpush2.msra.mxu0 %v157
    %226 = vmatprep.subr.mxu0 0.0
    %227 = vmatpush2.msra.mxu0 %v156
    %228 = vmatprep.subr.mxu0 0.0
    %229 = vmatpush2.msra.mxu0 %v155
    %230 = vmatprep.subr.mxu0 0.0
    %231 = vmatpush2.msra.mxu0 %v154
    %232 = vmatprep.subr.mxu0 0.0
    %233 = vmatpush2.msra.mxu0 %v153
    %234 = vmatprep.subr.mxu0 0.0
    %235 = vmatpush2.msra.mxu0 %v152
    %236 = vmatprep.subr.mxu0 0.0
    %237 = vmatpush2.msra.mxu0 %v151
    %238 = vmatprep.mubr.f32.mxu0 %v134
    %239 = vmatmul.mubr.f32.gmra.mxu0 %v133
    %v240 = vpop.f32.mrf.mxu0
    %v241 = vadd.f32 %v172, %v240
    %v242 = vpop.f32.mrf.mxu0
    %243 = vdwg.mxu0
    %v244 = vmax.f32 %v241, 0.0
    %v245 = vld [vmem:[%s5] sm:$0xff]
    %v246 = vld [vmem:[%s5 + $0x8] sm:$0xff]
    %v247 = vld [vmem:[%s5 + $0x10] sm:$0xff]
    %v248 = vld [vmem:[%s5 + $0x18] sm:$0xff]
    %v249 = vld [vmem:[%s5 + $0x20] sm:$0xff]
    %v250 = vld [vmem:[%s5 + $0x28] sm:$0xff]
    %v251 = vld [vmem:[%s5 + $0x30] sm:$0xff]
    %v252 = vld [vmem:[%s5 + $0x38] sm:$0xff]
    %v253 = vld [vmem:[%s5 + $0x40] sm:$0xff]
    %v254 = vld [vmem:[%s5 + $0x48] sm:$0xff]
    %v255 = vld [vmem:[%s5 + $0x50] sm:$0xff]
    %v256 = vld [vmem:[%s5 + $0x58] sm:$0xff]
    %v257 = vld [vmem:[%s5 + $0x60] sm:$0xff]
    %v258 = vld [vmem:[%s5 + $0x68] sm:$0xff]
    %v259 = vld [vmem:[%s5 + $0x70] sm:$0xff]
    %v260 = vld [vmem:[%s5 + $0x78] sm:$0xff]
    %v261 = vld [vmem:[%s6] sm:$0x1]
    %v263 = vlaneseq
    %v264 = vshrl.u32 %v263, 7
    %v265 = vsub.s32 0, %v264
    %v266 = vrot.slane %v261, %v265
    %268 = vmatprep.subr.mxu0 0.0
    %269 = vmatpush1.msra.mxu0 %v260
    %270 = vmatprep.subr.mxu0 0.0
    %271 = vmatpush1.msra.mxu0 %v259
    %272 = vmatprep.subr.mxu0 0.0
    %273 = vmatpush1.msra.mxu0 %v258
    %274 = vmatprep.subr.mxu0 0.0
    %275 = vmatpush1.msra.mxu0 %v257
    %276 = vmatprep.subr.mxu0 0.0
    %277 = vmatpush1.msra.mxu0 %v256
    %278 = vmatprep.subr.mxu0 0.0
    %279 = vmatpush1.msra.mxu0 %v255
    %280 = vmatprep.subr.mxu0 0.0
    %281 = vmatpush1.msra.mxu0 %v254
    %282 = vmatprep.subr.mxu0 0.0
    %283 = vmatpush1.msra.mxu0 %v253
    %284 = vmatprep.subr.mxu0 0.0
    %285 = vmatpush1.msra.mxu0 %v252
    %286 = vmatprep.subr.mxu0 0.0
    %287 = vmatpush1.msra.mxu0 %v251
    %288 = vmatprep.subr.mxu0 0.0
    %289 = vmatpush1.msra.mxu0 %v250
    %290 = vmatprep.subr.mxu0 0.0
    %291 = vmatpush1.msra.mxu0 %v249
    %292 = vmatprep.subr.mxu0 0.0
    %293 = vmatpush1.msra.mxu0 %v248
    %294 = vmatprep.subr.mxu0 0.0
    %295 = vmatpush1.msra.mxu0 %v247
    %296 = vmatprep.subr.mxu0 0.0
    %297 = vmatpush1.msra.mxu0 %v246
    %298 = vmatprep.subr.mxu0 0.0
    %299 = vmatpush1.msra.mxu0 %v245
    %300 = vmatprep.subr.mxu0 0.0
    %301 = vmatpush2.msra.mxu0 0.0
    %302 = vmatprep.subr.mxu0 0.0
    %303 = vmatpush2.msra.mxu0 0.0
    %304 = vmatprep.subr.mxu0 0.0
    %305 = vmatpush2.msra.mxu0 0.0
    %306 = vmatprep.subr.mxu0 0.0
    %307 = vmatpush2.msra.mxu0 0.0
    %308 = vmatprep.subr.mxu0 0.0
    %309 = vmatpush2.msra.mxu0 0.0
    %310 = vmatprep.subr.mxu0 0.0
    %311 = vmatpush2.msra.mxu0 0.0
    %312 = vmatprep.subr.mxu0 0.0
    %313 = vmatpush2.msra.mxu0 0.0
    %314 = vmatprep.subr.mxu0 0.0
    %315 = vmatpush2.msra.mxu0 0.0
    %316 = vmatprep.subr.mxu0 0.0
    %317 = vmatpush2.msra.mxu0 0.0
    %318 = vmatprep.subr.mxu0 0.0
    %319 = vmatpush2.msra.mxu0 0.0
    %320 = vmatprep.subr.mxu0 0.0
    %321 = vmatpush2.msra.mxu0 0.0
    %322 = vmatprep.subr.mxu0 0.0
    %323 = vmatpush2.msra.mxu0 0.0
    %324 = vmatprep.subr.mxu0 0.0
    %325 = vmatpush2.msra.mxu0 0.0
    %326 = vmatprep.subr.mxu0 0.0
    %327 = vmatpush2.msra.mxu0 0.0
    %328 = vmatprep.subr.mxu0 0.0
    %329 = vmatpush2.msra.mxu0 0.0
    %330 = vmatprep.subr.mxu0 0.0
    %331 = vmatpush2.msra.mxu0 0.0
    %332 = vmatprep.mubr.f32.mxu0 0.0
    %333 = vmatmul.mubr.f32.gmra.mxu0 %v244
    %v334 = vpop.f32.mrf.mxu0
    %v335 = vadd.f32 %v266, %v334
    %v336 = vpop.f32.mrf.mxu0
    %337 = vdwg.mxu0
    %vm338 = vcmask 64512
    %339 = vst.msk [vmem:[#allocation5] sm:$0xff] %vm338, %v335
    // Predicated region
    $region34: #{dqn_forward.1} parent=1 // pred_check
      _
    $region35: #{dqn_forward.1} parent=1 // pred_check_branch
      %341 = sbr.rel (0) target = $region37
    $region36: #{dqn_forward.1} parent=1 // pred_region
      %s343 = ssub.s32 128, 32
      %344 = vsyncadd [#allocation4], %s343
      %s345 = sshll.u32 [#allocation5], 4
      %s346 = int_to_ptr.vmem [resolvable:$true] %s345
      %351 = dma.vmem_to_hbm [thread:$0]  %s346, 32, %s7, [#allocation4], 32, 32, 2
    $region37: #{dqn_forward.1} parent=1 // pred_fallthru
      _
    // Predicated region
    $region38: #{dqn_forward.1} parent=1 // pred_check
      _
    $region39: #{dqn_forward.1} parent=1 // pred_check_branch
      %353 = sbr.rel (0) target = $region41
    $region40: #{dqn_forward.1} parent=1 // pred_region
      %354 = dma.done [#allocation4], 128
    $region41: #{dqn_forward.1} parent=1 // pred_fallthru
      _
    %355 = vsyncpa [#allocation3], 1
    %356 = vsyncpa [#allocation4], 1

</llo_original>
